<compile_context>
chip_gen: v5e
topology: v5e:2x2
jax: 0.10.0
libtpu: 0.0.40
codegen_flags: <defaults>
</compile_context>

<pallas_src>
import math

import numpy as np
import jax
import jax.numpy as jnp
from jax import lax
from jax.experimental import pallas as pl
from jax.experimental.pallas import tpu as pltpu


def _vmem_limit_bytes():
    """Generation-aware scoped-VMEM limit: physical capacity minus headroom,
    capped at ~100 MiB (v5e/v6e have 128 MiB/core, v7x only 64 MiB/core)."""
    cap = 128 * 1024 * 1024
    try:
        cap = int(getattr(pltpu.get_tpu_info(), "vmem_capacity_bytes", cap))
    except Exception:
        pass
    return max(32 * 1024 * 1024, min(cap - 16 * 1024 * 1024, 100 * 1024 * 1024))


_VMEM_LIMIT = _vmem_limit_bytes()


def _pick_q_tile(l_q, l_k, d, vmem_limit):
    """Largest L_Q tile for kernel 1 whose per-block transients (f32 score
    slab + f32 masked temp + double-buffered bf16 cnt block, all ~l_k*tq)
    fit the per-generation VMEM budget."""
    budget = 0.45 * vmem_limit
    def cost(t):
        return (l_k * t * (4 + 4 + 2 * 2)       # scores, masked temp, cnt x2 bufs
                + 2 * l_k * d * 2               # K double-buffered (bf16)
                + 2 * t * d * 2 + 2 * t * 4)    # Q / M double-buffered
    cands = [t for t in (1024, 768, 512, 384, 256, 128) if l_q % t == 0]
    if l_q <= 1024:
        cands = [l_q] + cands
    for t in cands:
        if cost(t) <= budget:
            return t
    return cands[-1] if cands else l_q


def _pick_ctx_tile(l_q, l_k, d, u, vmem_limit):
    """L_Q tile for kernel 2 (blocked causal cumsum + scatter)."""
    budget = 0.45 * vmem_limit
    def cost(t):
        return (2 * 2 * l_k * d * 2             # K and V, double-buffered bf16
                + 2 * t * t * 2                 # tri block x2 buffers (bf16)
                + 2 * t * d * 4                 # output tile x2 buffers
                + u * l_k * 4 + u * d * 4 + d * 4)
    cands = [t for t in (512, 256, 128) if l_q % t == 0]
    if l_q <= 512:
        cands = [l_q] + cands
    for t in cands:
        if cost(t) <= budget:
            return t
    return cands[-1] if cands else l_q


# ---------------------------------------------------------------------------
# Kernel 1: sparsity measure M for every query
# ---------------------------------------------------------------------------
def _prob_scores_kernel(q_ref, k_ref, cnt_ref, m_ref):
    # q_ref: (tq, D) bf16, k_ref: (L_K, D) bf16, cnt_ref: (tq, L_K) bf16,
    # m_ref: (tq, 1) f32.
    q = q_ref[...]
    k = k_ref[...]
    cnt = cnt_ref[...]
    l_k = k.shape[0]
    # S[i, j] = q_i . k_j  -- bf16 MXU operands, f32 accumulation.
    s = lax.dot_general(q, k, (((1,), (1,)), ((), ())),
                        preferred_element_type=jnp.float32)            # (tq, L_K)
    # max over the sampled keys only (presence mask = cnt > 0).  The -1e30
    # sentinel is safe: scores stay f32 through the subtraction (never bf16).
    max_sampled = jnp.max(jnp.where(cnt > 0, s, jnp.float32(-1e30)),
                          axis=-1, keepdims=True)                       # (tq, 1)
    # Weighted sum over sampled keys folded onto the MXU (the kernel is
    # VALU-bound; the MXU has slack): W = cnt @ K -> (tq, D), then
    # sum_i = <W_i, q_i> -- a tiny (tq, D) elementwise + lane reduce instead of
    # a dense (tq, L_K) multiply + reduce pass.
    w = jnp.dot(cnt, k, preferred_element_type=jnp.float32)             # (tq, D)
    sum_sampled = jnp.sum(w * q.astype(jnp.float32), axis=-1,
                          keepdims=True)                                # (tq, 1)
    m_ref[...] = max_sampled - sum_sampled * (1.0 / l_k)


def prob_scores(q, k, cnt):
    # q: (B,H,L_Q,D) bf16, k: (B,H,L_K,D) bf16, cnt: (L_Q, L_K) bf16
    B, H, L_Q, D = q.shape
    L_K = k.shape[2]
    tq = _pick_q_tile(L_Q, L_K, D, _VMEM_LIMIT)
    nq = L_Q // tq
    # Grid ordered (nq, B, H): the big cnt block index (i, 0) is constant over
    # the B*H inner steps, so its DMA is skipped; only the small K block is
    # re-fetched per step.  All axes are independent -> "parallel" (the leading
    # parallel axes also let v7x's two TensorCores split the work).
    # TODO(synk): for very long L_K additionally tile the key axis with running
    # max / weighted-sum accumulators (reduction axis last, "arbitrary").
    out = pl.pallas_call(
        _prob_scores_kernel,
        out_shape=jax.ShapeDtypeStruct((B, H, L_Q, 1), jnp.float32),
        grid=(nq, B, H),
        in_specs=[
            pl.BlockSpec((None, None, tq, D), lambda i, b, h: (b, h, i, 0)),
            pl.BlockSpec((None, None, L_K, D), lambda i, b, h: (b, h, 0, 0)),
            pl.BlockSpec((tq, L_K), lambda i, b, h: (i, 0)),
        ],
        out_specs=pl.BlockSpec((None, None, tq, 1), lambda i, b, h: (b, h, i, 0)),
        compiler_params=pltpu.CompilerParams(
            dimension_semantics=("parallel", "parallel", "parallel"),
            vmem_limit_bytes=_VMEM_LIMIT),
    )(q, k, cnt)
    return jnp.reshape(out, (B, H, L_Q))      # metadata-only squeeze


# ---------------------------------------------------------------------------
# Kernel 2: top-u sparse attention + blocked cumsum context + fused scatter
# ---------------------------------------------------------------------------
def _make_attn_kernel(scale, mask_flag):
    def kernel(idxc_ref, idxr_ref, q_ref, k_ref, v_ref, *rest):
        if mask_flag:
            tri_ref, ctx_ref, upd_ref, aux_ref = rest
        else:
            ctx_ref, upd_ref, aux_ref = rest
            tri_ref = None

        t = pl.program_id(2)
        tq2, d = ctx_ref.shape
        n_top = q_ref.shape[0]
        l_k = k_ref.shape[0]

        # --- top-u sparse attention: computed once per (b, h) at tile 0 and
        # stashed in VMEM scratch, reused by every tile's scatter. ---
        @pl.when(t == 0)
        def _():
            q = q_ref[...]                                   # (u, D)    bf16
            k = k_ref[...]                                   # (L_K, D)  bf16
            scores = lax.dot_general(q, k, (((1,), (1,)), ((), ())),
                                     preferred_element_type=jnp.float32) * scale
            if mask_flag:
                # ProbMask built in-kernel: masked where key_pos > index[i].
                col = lax.broadcasted_iota(jnp.int32, (n_top, l_k), 1)
                scores = jnp.where(col > idxc_ref[...], jnp.float32(-1e30), scores)
            smax = jnp.max(scores, axis=-1, keepdims=True)
            p = jnp.exp(scores - smax)
            # exact reciprocal: only (u, 1) elements, negligible EUP cost.
            attn = p * pl.reciprocal(jnp.sum(p, axis=-1, keepdims=True),
                                     approx=False)
            upd_ref[...] = jnp.dot(attn.astype(jnp.bfloat16), v_ref[...],
                                   preferred_element_type=jnp.float32)   # (u, D)
            if mask_flag:
                aux_ref[...] = jnp.zeros_like(aux_ref)       # running V prefix sum
            else:
                aux_ref[...] = jnp.mean(v_ref[...].astype(jnp.float32),
                                        axis=0, keepdims=True)           # (1, D)

        # --- initial context for this L_Q tile ---
        if mask_flag:
            # blocked cumsum: (tq2, tq2) lower-triangular constant @ V_tile on
            # the MXU plus the running prefix, instead of a full (L_V, L_V)
            # tri @ V per head.
            off = pl.multiple_of(t * tq2, tq2)
            v_tile = v_ref[pl.ds(off, tq2), :]               # (tq2, D) bf16
            base = (jnp.dot(tri_ref[...], v_tile,
                            preferred_element_type=jnp.float32) + aux_ref[...])
            aux_ref[...] = aux_ref[...] + jnp.sum(v_tile.astype(jnp.float32),
                                                  axis=0, keepdims=True)
        else:
            base = aux_ref[...]                              # (1, D) mean row,
                                                             # broadcast in where

        # --- fused row scatter of the updated top-u queries into this tile.
        # The one-hot selection matmul is exact (single 1.0 per row, f32). ---
        row = lax.broadcasted_iota(jnp.int32, (tq2, n_top), 0) + t * tq2
        sel_f = (row == idxr_ref[...]).astype(jnp.float32)   # (tq2, u)
        scat = jnp.dot(sel_f, upd_ref[...],
                       preferred_element_type=jnp.float32)   # (tq2, D)
        has = jnp.sum(sel_f, axis=-1, keepdims=True) > 0.5   # (tq2, 1)
        ctx_ref[...] = jnp.where(has, scat, base).astype(ctx_ref.dtype)

    return kernel


def prob_attn_context(q_red, k, v, idx_col, idx_row, tri, scale, mask_flag,
                      l_q, tq2, out_dtype):
    B, H, u, D = q_red.shape
    L_K = k.shape[2]
    L_V = v.shape[2]
    n_t = l_q // tq2
    inputs = [idx_col, idx_row, q_red, k, v]
    in_specs = [
        pl.BlockSpec((None, None, u, 1), lambda b, h, t: (b, h, 0, 0)),
        pl.BlockSpec((None, None, 1, u), lambda b, h, t: (b, h, 0, 0)),
        pl.BlockSpec((None, None, u, D), lambda b, h, t: (b, h, 0, 0)),
        pl.BlockSpec((None, None, L_K, D), lambda b, h, t: (b, h, 0, 0)),
        pl.BlockSpec((None, None, L_V, D), lambda b, h, t: (b, h, 0, 0)),
    ]
    if mask_flag:
        inputs.append(tri)
        # constant block index -> the small (tq2, tq2) triangular block is
        # fetched into VMEM once and stays resident.
        in_specs.append(pl.BlockSpec((tq2, tq2), lambda b, h, t: (0, 0)))
    return pl.pallas_call(
        _make_attn_kernel(float(scale), bool(mask_flag)),
        # context emitted directly in the caller's dtype: no extra HBM cast pass.
        out_shape=jax.ShapeDtypeStruct((B, H, l_q, D), out_dtype),
        grid=(B, H, n_t),
        in_specs=in_specs,
        out_specs=pl.BlockSpec((None, None, tq2, D), lambda b, h, t: (b, h, t, 0)),
        scratch_shapes=[pltpu.VMEM((u, D), jnp.float32),    # top-u updated rows
                        pltpu.VMEM((1, D), jnp.float32)],   # V prefix sum / mean
        compiler_params=pltpu.CompilerParams(
            dimension_semantics=("parallel", "parallel", "arbitrary"),
            vmem_limit_bytes=_VMEM_LIMIT),
    )(*inputs)


# ---------------------------------------------------------------------------
# ProbAttention.forward
# ---------------------------------------------------------------------------
def prob_attention_forward(queries, keys, values, rng_key, *,
                           factor=5, scale=None, mask_flag=True, debug=False):
    B, L_Q, H, D = queries.shape
    L_K = keys.shape[1]
    L_V = values.shape[1]

    q = jnp.transpose(queries, (0, 2, 1, 3))        # (B, H, L_Q, D)
    k = jnp.transpose(keys, (0, 2, 1, 3))           # (B, H, L_K, D)
    v = jnp.transpose(values, (0, 2, 1, 3))         # (B, H, L_V, D)

    # bf16 MXU operands; all matmuls accumulate in f32 inside the kernels.
    q_bf = q.astype(jnp.bfloat16)
    k_bf = k.astype(jnp.bfloat16)
    v_bf = v.astype(jnp.bfloat16)

    U_part = min(int(factor * np.ceil(np.log(L_K))), L_K)    # sample_k
    u = min(int(factor * np.ceil(np.log(L_Q))), L_Q)         # n_top
    assert U_part < 256, "bf16 key multiplicities are exact only below 256"

    # torch.randint(L_K, (L_Q, sample_k)) equivalent (shared over B, H), turned
    # into a per-query key-multiplicity matrix by a scatter-add straight into
    # bf16 (no f32 intermediate / cast pass in HBM).
    index_sample = jax.random.randint(rng_key, (L_Q, U_part), 0, L_K)
    cnt = (jnp.zeros((L_Q, L_K), jnp.bfloat16)
           .at[jnp.arange(L_Q)[:, None], index_sample].add(jnp.bfloat16(1.0)))

    # --- _prob_QK: sparsity measure + top-u query selection ---
    M = prob_scores(q_bf, k_bf, cnt)                          # (B, H, L_Q) f32
    _, index = lax.top_k(M, u)                                # (B, H, u)
    index = index.astype(jnp.int32)
    q_red = jnp.take_along_axis(q_bf, index[..., None], axis=2)   # (B, H, u, D)

    idx_col = index[..., :, None]                             # (B, H, u, 1)
    idx_row = index[..., None, :]                             # (B, H, 1, u)

    sc = float(scale) if scale is not None else 1.0 / math.sqrt(D)

    tq2 = _pick_ctx_tile(L_Q, L_K, D, u, _VMEM_LIMIT)
    tri = None
    if mask_flag:
        assert L_Q == L_V
        r = jnp.arange(tq2)
        tri = (r[:, None] >= r[None, :]).astype(jnp.bfloat16)     # (tq2, tq2)

    # scale, ProbMask, softmax, @V, blocked cumsum context and row scatter --
    # one kernel; the context tensor is written to HBM exactly once.
    context = prob_attn_context(q_red, k_bf, v_bf, idx_col, idx_row, tri,
                                sc, mask_flag, L_Q, tq2, queries.dtype)

    # output_attention=False -> attn is None (dropout is defined but unused in forward)
    if debug:
        return context, None, {"M": M, "index": index, "index_sample": index_sample}
    return context, None


# ---------------------------------------------------------------------------
# NumPy reference (for the self-check in __main__)
# ---------------------------------------------------------------------------
def _reference_context(qn, kn, vn, index, scale, mask_flag):
    """Pure-NumPy ProbAttention context given the selected top-u indices."""
    B, H, L_Q, D = qn.shape
    L_K = kn.shape[2]
    if mask_flag:
        ctx = np.cumsum(vn, axis=2)
    else:
        ctx = np.broadcast_to(vn.mean(axis=2, keepdims=True), (B, H, L_Q, D)).copy()
    for b in range(B):
        for h in range(H):
            idx = index[b, h]
            s = qn[b, h, idx] @ kn[b, h].T * scale
            if mask_flag:
                jj = np.arange(L_K)[None, :]
                s = np.where(jj > idx[:, None], -np.inf, s)
            s = s - s.max(axis=-1, keepdims=True)
            p = np.exp(s)
            p = p / p.sum(axis=-1, keepdims=True)
            ctx[b, h, idx] = p @ vn[b, h]
    return ctx


if __name__ == "__main__":
    key = jax.random.PRNGKey(0)
    kq, kk, kv, ks = jax.random.split(key, 4)
    B, L, H, D = 2, 16, 4, 32
    queries = jax.random.normal(kq, (B, L, H, D), jnp.float32)
    keys = jax.random.normal(kk, (B, L, H, D), jnp.float32)
    values = jax.random.normal(kv, (B, L, H, D), jnp.float32)

    context, attn, dbg = prob_attention_forward(queries, keys, values, ks, debug=True)
    context = jax.block_until_ready(context)
    assert context.shape == (B, H, L, D)
    assert attn is None
    assert bool(jnp.all(jnp.isfinite(context)))

    # --- numerical self-check against a NumPy reference (loose tol for bf16) ---
    qn = np.transpose(np.asarray(queries), (0, 2, 1, 3)).astype(np.float32)
    kn = np.transpose(np.asarray(keys), (0, 2, 1, 3)).astype(np.float32)
    vn = np.transpose(np.asarray(values), (0, 2, 1, 3)).astype(np.float32)

    # kernel 1: sparsity measure M
    idx_s = np.asarray(dbg["index_sample"])                        # (L, U_part)
    s_full = np.einsum("bhqd,bhkd->bhqk", qn, kn)
    samp = s_full[:, :, np.arange(L)[:, None], idx_s]              # (B, H, L, U_part)
    m_ref = samp.max(-1) - samp.sum(-1) / L
    np.testing.assert_allclose(np.asarray(dbg["M"]), m_ref, rtol=0.02, atol=0.25)

    # kernel 2: masked sparse attention + blocked cumsum context + fused scatter,
    # evaluated at the indices the kernel selected.
    ref = _reference_context(qn, kn, vn, np.asarray(dbg["index"]),
                             1.0 / math.sqrt(D), True)
    np.testing.assert_allclose(np.asarray(context, np.float32), ref,
                               rtol=0.02, atol=0.25)

    print("KERNEL_OK")
</pallas_src>

<mosaic_0001>
module attributes {stable_mosaic.version = 11 : i64} {
  func.func @_prob_scores_kernel(%arg0: i32, %arg1: i32, %arg2: i32, %arg3: memref<1x1x16x32xbf16, #tpu.memory_space<vmem>>, %arg4: memref<1x1x16x32xbf16, #tpu.memory_space<vmem>>, %arg5: memref<16x16xbf16, #tpu.memory_space<vmem>>, %arg6: memref<1x1x16x1xf32, #tpu.memory_space<vmem>>) attributes {dimension_semantics = [#tpu.dimension_semantics<parallel>, #tpu.dimension_semantics<parallel>, #tpu.dimension_semantics<parallel>], iteration_bounds = array<i64: 1, 2, 4>, scalar_prefetch = 0 : i64, scratch_operands = 0 : i64, tpu.core_type = #tpu.core_type<tc>, window_params = [{transform_indices = @transform_0, window_bounds = array<i64: 1, 1, 16, 32>}, {transform_indices = @transform_1, window_bounds = array<i64: 1, 1, 16, 32>}, {transform_indices = @transform_2, window_bounds = array<i64: 16, 16>}, {transform_indices = @transform_3, window_bounds = array<i64: 1, 1, 16, 1>}]} {
    %c0 = arith.constant 0 : index
    %c0_0 = arith.constant 0 : index
    %c0_1 = arith.constant 0 : index
    %c0_2 = arith.constant 0 : index
    %0 = vector.load %arg3[%c0, %c0_0, %c0_1, %c0_2] : memref<1x1x16x32xbf16, #tpu.memory_space<vmem>>, vector<1x1x16x32xbf16>
    %1 = vector.shape_cast %0 : vector<1x1x16x32xbf16> to vector<16x32xbf16>
    %c0_3 = arith.constant 0 : index
    %c0_4 = arith.constant 0 : index
    %c0_5 = arith.constant 0 : index
    %c0_6 = arith.constant 0 : index
    %2 = vector.load %arg4[%c0_3, %c0_4, %c0_5, %c0_6] : memref<1x1x16x32xbf16, #tpu.memory_space<vmem>>, vector<1x1x16x32xbf16>
    %3 = vector.shape_cast %2 : vector<1x1x16x32xbf16> to vector<16x32xbf16>
    %c0_7 = arith.constant 0 : index
    %c0_8 = arith.constant 0 : index
    %4 = vector.load %arg5[%c0_7, %c0_8] : memref<16x16xbf16, #tpu.memory_space<vmem>>, vector<16x16xbf16>
    %cst = arith.constant dense<0.000000e+00> : vector<16x16xf32>
    %5 = tpu.matmul %1, %3, %cst {dimension_numbers = #tpu.dot_dimension_numbers<[1], [1], [0], [0], [0, 0, 1, 0], [], []>} : vector<16x32xbf16>, vector<16x32xbf16>, vector<16x16xf32> -> vector<16x16xf32>
    %cst_9 = arith.constant 0.000000e+00 : bf16
    %6 = vector.broadcast %cst_9 : bf16 to vector<16x16xbf16>
    %7 = arith.cmpf ogt, %4, %6 : vector<16x16xbf16>
    %cst_10 = arith.constant -1.000000e+30 : f32
    %8 = vector.broadcast %cst_10 : f32 to vector<16x16xf32>
    %9 = arith.select %7, %5, %8 : vector<16x16xi1>, vector<16x16xf32>
    %cst_11 = arith.constant dense<0xFF800000> : vector<16xf32>
    %10 = vector.multi_reduction <maximumf>, %9, %cst_11 [1] : vector<16x16xf32> to vector<16xf32>
    %11 = vector.shape_cast %10 : vector<16xf32> to vector<16x1xf32>
    %cst_12 = arith.constant dense<0.000000e+00> : vector<16x32xf32>
    %12 = tpu.matmul %4, %3, %cst_12 {dimension_numbers = #tpu.dot_dimension_numbers<[1], [0], [0], [1], [0, 0, 1, 1], [], []>} : vector<16x16xbf16>, vector<16x32xbf16>, vector<16x32xf32> -> vector<16x32xf32>
    %13 = arith.extf %1 : vector<16x32xbf16> to vector<16x32xf32>
    %14 = arith.mulf %12, %13 : vector<16x32xf32>
    %cst_13 = arith.constant dense<0.000000e+00> : vector<16xf32>
    %15 = vector.multi_reduction <add>, %14, %cst_13 [1] : vector<16x32xf32> to vector<16xf32>
    %16 = vector.shape_cast %15 : vector<16xf32> to vector<16x1xf32>
    %cst_14 = arith.constant 6.250000e-02 : f32
    %17 = vector.broadcast %cst_14 : f32 to vector<16x1xf32>
    %18 = arith.mulf %16, %17 : vector<16x1xf32>
    %19 = arith.subf %11, %18 : vector<16x1xf32>
    %c0_15 = arith.constant 0 : index
    %c0_16 = arith.constant 0 : index
    %c0_17 = arith.constant 0 : index
    %c0_18 = arith.constant 0 : index
    %20 = vector.load %arg6[%c0_15, %c0_16, %c0_17, %c0_18] : memref<1x1x16x1xf32, #tpu.memory_space<vmem>>, vector<1x1x16x1xf32>
    %21 = vector.shape_cast %20 : vector<1x1x16x1xf32> to vector<16x1xf32>
    %22 = vector.shape_cast %19 : vector<16x1xf32> to vector<1x1x16x1xf32>
    tpu.vector_store %arg6[%c0_15, %c0_16, %c0_17, %c0_18], %22 {strides = array<i32>} : memref<1x1x16x1xf32, #tpu.memory_space<vmem>>, vector<1x1x16x1xf32>,
    return
  }
  func.func @transform_0(%arg0: i32, %arg1: i32, %arg2: i32) -> (i32, i32, i32, i32) {
    %c0_i32 = arith.constant 0 : i32
    %c0_i32_0 = arith.constant 0 : i32
    return %arg1, %arg2, %arg0, %c0_i32 : i32, i32, i32, i32
  }
  func.func @transform_1(%arg0: i32, %arg1: i32, %arg2: i32) -> (i32, i32, i32, i32) {
    %c0_i32 = arith.constant 0 : i32
    %c0_i32_0 = arith.constant 0 : i32
    %c0_i32_1 = arith.constant 0 : i32
    return %arg1, %arg2, %c0_i32, %c0_i32_0 : i32, i32, i32, i32
  }
  func.func @transform_2(%arg0: i32, %arg1: i32, %arg2: i32) -> (i32, i32) {
    %c0_i32 = arith.constant 0 : i32
    %c0_i32_0 = arith.constant 0 : i32
    return %arg0, %c0_i32 : i32, i32
  }
  func.func @transform_3(%arg0: i32, %arg1: i32, %arg2: i32) -> (i32, i32, i32, i32) {
    %c0_i32 = arith.constant 0 : i32
    %c0_i32_0 = arith.constant 0 : i32
    return %arg1, %arg2, %arg0, %c0_i32 : i32, i32, i32, i32
  }
}

</mosaic_0001>

<llo_original>
// kernel: tpu_custom_call.1
$region0: #{tpu_custom_call.1}
  #allocation0 [shape = 'u32[]', space=smem, size = 0x4, offset = 0x4, fixed_abs, tag = 'smem constant byte address 0x4 - core index']
  #allocation1 [shape = 'u32[72,128]{1,0:T(1,128)}', space=vmem, size = 0x9000, scoped, tag = 'internal scratch']
  %s0 = inlined_call_operand.hbm [shape: bf16[2,4,16,32], index: 0, kind: input, shape index: {}]
  %s1 = inlined_call_operand.hbm [shape: bf16[2,4,16,32], index: 1, kind: input, shape index: {}]
  %s2 = inlined_call_operand.hbm [shape: bf16[16,16], index: 2, kind: input, shape index: {}]
  %s3 = inlined_call_operand.vmem [shape: f32[2,4,16,1], index: 3, kind: output, shape index: {}]
  %s4 = sld [smem:[#allocation0]]
  $region57: #{tpu_custom_call.1} parent=0
    _
  %s6 = ssub.s32 1, %s4
  %s7 = scalar_select 0, %s6, %s4
  $region1: #{tpu_custom_call.1} parent=0
    #allocation2 [shape = 'u8[8192]{0}', space=vmem, size = 0x2000, scoped, tag = 'input window, operand 0']
    #allocation3 [shape = 's32[2]{0}', space=sflag, size = 0x8, scoped, tag = 'scoped memory for tpu_custom_call.1']
    #allocation4 [shape = 'u8[8192]{0}', space=vmem, size = 0x2000, scoped, tag = 'input window, operand 1']
    #allocation5 [shape = 's32[2]{0}', space=sflag, size = 0x8, scoped, tag = 'scoped memory for tpu_custom_call.1']
    #allocation6 [shape = 'u8[4096]{0}', space=vmem, size = 0x1000, scoped, tag = 'input window, operand 2, single buffered']
    %8 = vsyncpa [#allocation3], 0
    %s9 = scalar_lea.sflag [#allocation3], 1
    %10 = vsyncpa %s9, 0
    %11 = vsyncpa [#allocation5], 0
    %s12 = scalar_lea.sflag [#allocation5], 1
    %13 = vsyncpa %s12, 0
    loop: start=0, step=1, limit=10
    $region2: #{tpu_custom_call.1} parent=1 // loop_pre_header
      _
    $region3: #{tpu_custom_call.1} parent=1 // loop_header
      %s15 = sphi 0, %s19
      %p16 = scmp.ge.s32.totalorder %s15, 10
      %s22 = sphi 0, %s41
      %s23 = sphi 0, %s37
      %s24 = sphi 0, %s33
      %s25 = sphi 0, %s22
      %s26 = sphi 0, %s23
      %s27 = sphi 0, %s24
      %s28 = sphi 0, %s25
      %s29 = sphi 0, %s26
      %s30 = sphi 0, %s27
      %s48 = sphi 0, %s50
      %s51 = sphi 0, %s48
      %s52 = sphi 0, %s51
      %s68 = sphi 0, %s52
      %s76 = sphi 0, %s78
      %s79 = sphi 0, %s76
      %s80 = sphi 0, %s79
      %s96 = sphi 0, %s80
      %s102 = sphi 0, %s104
      %s105 = sphi 0, %s102
      %s106 = sphi 0, %s105
      %s122 = sphi 0, %s106
      %s132 = sphi 0, %s134
      %s135 = sphi 0, %s132
      %s136 = sphi 0, %s135
      %s152 = sphi 0, %s136
    $region4: #{tpu_custom_call.1} parent=1 // loop_header_branch
      %18 = sbr.rel (%p16) target = $region8
    $region5: #{tpu_custom_call.1} parent=1 // loop_body
      %s20 = ssub.s32 %s15, 1
      %s21 = ssub.s32 %s15, 2
      %s31 = sadd.s32 1, %s24
      %p32 = scmp.ge.s32.totalorder %s31, 4
      %s33 = scalar_select %p32, 0, %s31
      %s34 = sadd.s32 1, %s23
      %s35 = scalar_select %p32, %s34, %s23
      %p36 = scmp.ge.s32.totalorder %s35, 2
      %s37 = scalar_select %p36, 0, %s35
      %s38 = sadd.s32 1, %s22
      %s39 = scalar_select %p36, %s38, %s22
      %p40 = scmp.ge.s32.totalorder %s39, 1
      %s41 = scalar_select %p40, 0, %s39
      %s42 = ssub.s32 %s23, %s37
      %s43 = ssub.s32 %s24, %s33
      %s44 = sor.u32 %s42, %s43
      %s45 = ssub.s32 %s22, %s41
      %s46 = sor.u32 %s44, %s45
      %p47 = scmp.eq.s32.totalorder %s46, 0
      %s49 = sadd.s32 %s48, 1
      %s50 = scalar_select %p47, %s48, %s49
      %p53 = pneg %p47
      %p54 = scmp.eq.s32.totalorder %s15, 7
      %p55 = por %p53, %p54
      %p56 = scmp.ne.s32.totalorder %s48, %s51
      %p57 = scmp.eq.s32.totalorder %s15, 0
      %p58 = por %p56, %p57
      %p59 = scmp.ne.s32.totalorder %s48, %s51
      %p60 = scmp.eq.s32.totalorder %s20, 7
      %p61 = por %p59, %p60
      %p62 = scmp.ne.s32.totalorder %s51, %s52
      %p63 = scmp.eq.s32.totalorder %s20, 0
      %p64 = por %p62, %p63
      %p65 = scmp.ne.s32.totalorder %s51, %s52
      %p66 = scmp.eq.s32.totalorder %s21, 7
      %p67 = por %p65, %p66
      %p69 = scmp.ne.s32.totalorder %s52, %s68
      %p70 = scmp.eq.s32.totalorder %s21, 0
      %p71 = por %p69, %p70
      %s72 = ssub.s32 %s23, %s37
      %s73 = ssub.s32 %s24, %s33
      %s74 = sor.u32 %s72, %s73
      %p75 = scmp.eq.s32.totalorder %s74, 0
      %s77 = sadd.s32 %s76, 1
      %s78 = scalar_select %p75, %s76, %s77
      %p81 = pneg %p75
      %p82 = scmp.eq.s32.totalorder %s15, 7
      %p83 = por %p81, %p82
      %p84 = scmp.ne.s32.totalorder %s76, %s79
      %p85 = scmp.eq.s32.totalorder %s15, 0
      %p86 = por %p84, %p85
      %p87 = scmp.ne.s32.totalorder %s76, %s79
      %p88 = scmp.eq.s32.totalorder %s20, 7
      %p89 = por %p87, %p88
      %p90 = scmp.ne.s32.totalorder %s79, %s80
      %p91 = scmp.eq.s32.totalorder %s20, 0
      %p92 = por %p90, %p91
      %p93 = scmp.ne.s32.totalorder %s79, %s80
      %p94 = scmp.eq.s32.totalorder %s21, 7
      %p95 = por %p93, %p94
      %p97 = scmp.ne.s32.totalorder %s80, %s96
      %p98 = scmp.eq.s32.totalorder %s21, 0
      %p99 = por %p97, %p98
      %s100 = ssub.s32 %s22, %s41
      %p101 = scmp.eq.s32.totalorder %s100, 0
      %s103 = sadd.s32 %s102, 1
      %s104 = scalar_select %p101, %s102, %s103
      %p107 = pneg %p101
      %p108 = scmp.eq.s32.totalorder %s15, 7
      %p109 = por %p107, %p108
      %p110 = scmp.ne.s32.totalorder %s102, %s105
      %p111 = scmp.eq.s32.totalorder %s15, 0
      %p112 = por %p110, %p111
      %p113 = scmp.ne.s32.totalorder %s102, %s105
      %p114 = scmp.eq.s32.totalorder %s20, 7
      %p115 = por %p113, %p114
      %p116 = scmp.ne.s32.totalorder %s105, %s106
      %p117 = scmp.eq.s32.totalorder %s20, 0
      %p118 = por %p116, %p117
      %p119 = scmp.ne.s32.totalorder %s105, %s106
      %p120 = scmp.eq.s32.totalorder %s21, 7
      %p121 = por %p119, %p120
      %p123 = scmp.ne.s32.totalorder %s106, %s122
      %p124 = scmp.eq.s32.totalorder %s21, 0
      %p125 = por %p123, %p124
      %s126 = ssub.s32 %s23, %s37
      %s127 = ssub.s32 %s24, %s33
      %s128 = sor.u32 %s126, %s127
      %s129 = ssub.s32 %s22, %s41
      %s130 = sor.u32 %s128, %s129
      %p131 = scmp.eq.s32.totalorder %s130, 0
      %s133 = sadd.s32 %s132, 1
      %s134 = scalar_select %p131, %s132, %s133
      %p137 = pneg %p131
      %p138 = scmp.eq.s32.totalorder %s15, 7
      %p139 = por %p137, %p138
      %p140 = scmp.ne.s32.totalorder %s132, %s135
      %p141 = scmp.eq.s32.totalorder %s15, 0
      %p142 = por %p140, %p141
      %p143 = scmp.ne.s32.totalorder %s132, %s135
      %p144 = scmp.eq.s32.totalorder %s20, 7
      %p145 = por %p143, %p144
      %p146 = scmp.ne.s32.totalorder %s135, %s136
      %p147 = scmp.eq.s32.totalorder %s20, 0
      %p148 = por %p146, %p147
      %p149 = scmp.ne.s32.totalorder %s135, %s136
      %p150 = scmp.eq.s32.totalorder %s21, 7
      %p151 = por %p149, %p150
      %p153 = scmp.ne.s32.totalorder %s136, %s152
      %p154 = scmp.eq.s32.totalorder %s21, 0
      %p155 = por %p153, %p154
      %p156 = scmp.le.s32.totalorder 1, %s15
      %p157 = scmp.lt.s32.totalorder %s15, 9
      %p158 = pnand %p156, %p157
      %p159 = pneg %p158
      // Predicated region
      $region9: #{tpu_custom_call.1} parent=5 // pred_check
        _
      $region10: #{tpu_custom_call.1} parent=5 // pred_check_branch
        %161 = sbr.rel (%p158) target = $region12
      $region11: #{tpu_custom_call.1} parent=5 // pred_region
        %s162 = ssub.s32 %s15, 1
        // Predicated region
        $region13: #{tpu_custom_call.1} parent=11 // pred_check
          %p163 = pneg %p118
        $region14: #{tpu_custom_call.1} parent=11 // pred_check_branch
          %165 = sbr.rel (%p163) target = $region16
        $region15: #{tpu_custom_call.1} parent=11 // pred_region
          %s166 = smul.u32 2, %s25
          %168 = vsyncadd [#allocation5], 0
          %s169 = smul.addr %s166, 4
          %s170 = scalar_lea.hbm %s2, %s169
          %s171 = sshll.u32 %s170, 4
          %s172 = int_to_ptr.hbm [resolvable:$true] %s171
          %s173 = sshll.u32 [#allocation6], 4
          %s174 = int_to_ptr.vmem [resolvable:$true] %s173
          %179 = dma.hbm_to_vmem [thread:$0]  %s172, 128, %s174, [#allocation5], 64, 64, 4
        $region16: #{tpu_custom_call.1} parent=11 // pred_fallthru
          _
      $region12: #{tpu_custom_call.1} parent=5 // pred_fallthru
        _
      %p180 = scmp.lt.s32.totalorder %s15, 8
      // Predicated region
      $region17: #{tpu_custom_call.1} parent=5 // pred_check
        %p181 = pneg %p180
      $region18: #{tpu_custom_call.1} parent=5 // pred_check_branch
        %183 = sbr.rel (%p181) target = $region20
      $region19: #{tpu_custom_call.1} parent=5 // pred_region
        // Predicated region
        $region21: #{tpu_custom_call.1} parent=19 // pred_check
          %p184 = pneg %p58
        $region22: #{tpu_custom_call.1} parent=19 // pred_check_branch
          %186 = sbr.rel (%p184) target = $region24
        $region23: #{tpu_custom_call.1} parent=19 // pred_region
          %s187 = sand.u32 %s48, 1
          %s188 = scalar_lea.sflag [#allocation3], %s187
          %s189 = sand.u32 %s48, 1
          %s190 = smul.addr %s189, 8
          %s191 = scalar_lea.vmem [#allocation2], %s190
          %s192 = smul.u32 2, %s22
          %194 = vsyncadd %s188, 0
          %s195 = smul.addr %s24, 2
          %s196 = sadd.s32 %s192, %s195
          %s197 = smul.addr %s23, 8
          %s198 = sadd.s32 %s196, %s197
          %s199 = smul.addr %s198, 4
          %s200 = scalar_lea.hbm %s0, %s199
          %s201 = sshll.u32 %s200, 4
          %s202 = int_to_ptr.hbm [resolvable:$true] %s201
          %s203 = sshll.u32 %s191, 4
          %s204 = int_to_ptr.vmem [resolvable:$true] %s203
          %209 = dma.hbm_to_vmem [thread:$0]  %s202, 128, %s204, %s188, 64, 64, 4
        $region24: #{tpu_custom_call.1} parent=19 // pred_fallthru
          _
        // Predicated region
        $region25: #{tpu_custom_call.1} parent=19 // pred_check
          %p210 = pneg %p86
        $region26: #{tpu_custom_call.1} parent=19 // pred_check_branch
          %212 = sbr.rel (%p210) target = $region28
        $region27: #{tpu_custom_call.1} parent=19 // pred_region
          %s213 = sand.u32 %s15, 1
          %s214 = scalar_lea.sflag [#allocation5], %s213
          %s215 = sand.u32 %s76, 1
          %s216 = smul.addr %s215, 8
          %s217 = scalar_lea.vmem [#allocation4], %s216
          %219 = vsyncadd %s214, 0
          %s220 = smul.addr %s24, 2
          %s221 = smul.addr %s23, 8
          %s222 = sadd.s32 %s220, %s221
          %s223 = smul.addr %s222, 4
          %s224 = scalar_lea.hbm %s1, %s223
          %s225 = sshll.u32 %s224, 4
          %s226 = int_to_ptr.hbm [resolvable:$true] %s225
          %s227 = sshll.u32 %s217, 4
          %s228 = int_to_ptr.vmem [resolvable:$true] %s227
          %233 = dma.hbm_to_vmem [thread:$0]  %s226, 128, %s228, %s214, 64, 64, 4
        $region28: #{tpu_custom_call.1} parent=19 // pred_fallthru
          _
      $region20: #{tpu_custom_call.1} parent=5 // pred_fallthru
        _
      %p234 = scmp.le.s32.totalorder 1, %s15
      %p235 = scmp.lt.s32.totalorder %s15, 9
      %p236 = pnand %p234, %p235
      %p237 = pneg %p236
      // Predicated region
      $region29: #{tpu_custom_call.1} parent=5 // pred_check
        _
      $region30: #{tpu_custom_call.1} parent=5 // pred_check_branch
        %239 = sbr.rel (%p236) target = $region32
      $region31: #{tpu_custom_call.1} parent=5 // pred_region
        %s240 = ssub.s32 %s15, 1
        %s241 = sand.u32 %s51, 1
        %s242 = scalar_lea.sflag [#allocation3], %s241
        %s243 = sand.u32 %s51, 1
        %s244 = smul.addr %s243, 8
        %s245 = scalar_lea.vmem [#allocation2], %s244
        // Predicated region
        $region33: #{tpu_custom_call.1} parent=31 // pred_check
          %p246 = pneg %p64
        $region34: #{tpu_custom_call.1} parent=31 // pred_check_branch
          %248 = sbr.rel (%p246) target = $region36
        $region35: #{tpu_custom_call.1} parent=31 // pred_region
          %250 = dma.done %s242, 128
        $region36: #{tpu_custom_call.1} parent=31 // pred_fallthru
          _
        %s251 = sand.u32 %s20, 1
        %s252 = scalar_lea.sflag [#allocation5], %s251
        %s253 = sand.u32 %s79, 1
        %s254 = smul.addr %s253, 8
        %s255 = scalar_lea.vmem [#allocation4], %s254
        // Predicated region
        $region37: #{tpu_custom_call.1} parent=31 // pred_check
          %p256 = pneg %p92
        $region38: #{tpu_custom_call.1} parent=31 // pred_check_branch
          %258 = sbr.rel (%p256) target = $region40
        $region39: #{tpu_custom_call.1} parent=31 // pred_region
          %260 = dma.done %s252, 128
        $region40: #{tpu_custom_call.1} parent=31 // pred_fallthru
          _
        // Predicated region
        $region41: #{tpu_custom_call.1} parent=31 // pred_check
          %p261 = pneg %p118
        $region42: #{tpu_custom_call.1} parent=31 // pred_check_branch
          %263 = sbr.rel (%p261) target = $region44
        $region43: #{tpu_custom_call.1} parent=31 // pred_region
          %265 = dma.done [#allocation5], 128
        $region44: #{tpu_custom_call.1} parent=31 // pred_fallthru
          _
        %s266 = sand.u32 %s51, 1
        %s267 = scalar_lea.sflag [#allocation3], %s266
        %s268 = sand.u32 %s51, 1
        %s269 = smul.addr %s268, 8
        %s270 = scalar_lea.vmem [#allocation2], %s269
        %p271 = pneg %p64
        %p272 = pneg %p61
        %s273 = sand.u32 %s20, 1
        %s274 = scalar_lea.sflag [#allocation5], %s273
        %s275 = sand.u32 %s79, 1
        %s276 = smul.addr %s275, 8
        %s277 = scalar_lea.vmem [#allocation4], %s276
        %p278 = pneg %p92
        %p279 = pneg %p89
        %p280 = pneg %p118
        %p281 = pneg %p115
        %p282 = pneg %p148
        %p283 = pneg %p145
        %s284 = smul.u32 2, %s25
        %p285 = scmp.lt.s32.totalorder %s26, 1
        %s286 = scalar_select %p285, %s26, 1
        %p287 = scmp.lt.s32.totalorder %s27, 3
        %s288 = scalar_select %p287, %s27, 3
        %p289 = scmp.lt.s32.totalorder %s284, 1
        %s290 = scalar_select %p289, %s284, 1
        %s291 = smul.addr %s288, 2
        %s292 = sadd.s32 %s290, %s291
        %s293 = smul.addr %s286, 8
        %s294 = sadd.s32 %s292, %s293
        %s295 = smul.addr %s294, 8
        %s296 = scalar_lea.vmem %s3, %s295
        %s297 = smul.u32 2, %s25
        %s298 = smul.u32 2, %s25
        %s299 = smul.u32 2, %s25
        %p300 = scmp.lt.s32.totalorder %s26, 1
        %s301 = scalar_select %p300, %s26, 1
        %p302 = scmp.lt.s32.totalorder %s27, 3
        %s303 = scalar_select %p302, %s27, 3
        %p304 = scmp.lt.s32.totalorder %s299, 1
        %s305 = scalar_select %p304, %s299, 1
        %s306 = smul.addr %s303, 2
        %s307 = sadd.s32 %s305, %s306
        %s308 = smul.addr %s301, 8
        %s309 = sadd.s32 %s307, %s308
        %s310 = smul.addr %s309, 8
        %s311 = scalar_lea.vmem %s3, %s310
        %s312 = smul.u32 2, %s25
        %v314 = vld [vmem:[%s245] sm:$0xf]
        %v315 = vld [vmem:[%s245 + $0x4] sm:$0xf]
        %v316 = vld [vmem:[%s255] sm:$0xf]
        %v317 = vld [vmem:[%s255 + $0x4] sm:$0xf]
        %v318 = vld [vmem:[#allocation6] sm:$0xf]
        %v319 = vld [vmem:[#allocation6 + $0x4] sm:$0xf]
        %v322 = vunpack.c.l.b16 %v314
        %v323 = vunpack.c.l.b16 %v315
        %v324 = vpack.c.b16 %v323, %v322
        %v327 = vunpack.c.l.b16 %v316
        %v328 = vunpack.c.l.b16 %v317
        %v329 = vpack.c.b16 %v328, %v327
        %vm330 = vcmask 261120
        %v332 = vsel %vm330, %v324, 0
        %v335 = vsel %vm330, %v329, 0
        %337 = vmatpush.bf16.xpose.msra.mxu0 0
        %338 = vmatpush.bf16.xpose.msra.mxu0 0
        %339 = vmatpush.bf16.xpose.msra.mxu0 0
        %340 = vmatpush.bf16.xpose.msra.mxu0 0
        %341 = vmatpush.bf16.xpose.msra.mxu0 0
        %342 = vmatpush.bf16.xpose.msra.mxu0 0
        %343 = vmatpush.bf16.xpose.msra.mxu0 0
        %344 = vmatpush.bf16.xpose.msra.mxu0 %v335
        %345 = vmatmul.bf16.gmra.mxu0 %v332
        %v346 = vpop.f32.mrf.mxu0
        %v347 = vadd.f32 0.0, %v346
        %v348 = vpop.f32.mrf.mxu0
        %v349 = vadd.f32 0.0, %v348
        %350 = vdwg.mxu0
        %v351 = vunpack.c.l.bf16 %v318
        %v352 = vunpack.c.l.bf16 %v319
        %vm353 = vcmp.gt.f32.partialorder %v351, 0.0
        %vm354 = vcmp.gt.f32.partialorder %v352, 0.0
        %v355 = vsel %vm353, %v347, -1e+30
        %v356 = vsel %vm354, %v349, -1e+30
        %vm357 = vcmask 130048
        %v358 = vsel %vm357, %v355, -inf
        %359 = vmax.xlane.f32.xlu0 %v358
        %v360 = vpop.xlane.xlu0 %359
        %v361 = vsel %vm357, %v356, -inf
        %362 = vmax.xlane.f32.xlu0 %v361
        %v363 = vpop.xlane.xlu0 %362
        %v366 = vunpack.c.l.b16 %v318
        %v367 = vunpack.c.l.b16 %v319
        %v368 = vpack.c.b16 %v367, %v366
        %v371 = vsel %vm357, %v368, 0
        %373 = vmatpush.bf16.msra.mxu0 0
        %374 = vmatpush.bf16.msra.mxu0 0
        %375 = vmatpush.bf16.msra.mxu0 0
        %376 = vmatpush.bf16.msra.mxu0 0
        %377 = vmatpush.bf16.msra.mxu0 0
        %378 = vmatpush.bf16.msra.mxu0 0
        %379 = vmatpush.bf16.msra.mxu0 0
        %380 = vmatpush.bf16.msra.mxu0 %v329
        %381 = vmatmul.bf16.gmra.mxu0 %v371
        %v382 = vpop.f32.mrf.mxu0
        %v383 = vadd.f32 0.0, %v382
        %v384 = vpop.f32.mrf.mxu0
        %v385 = vadd.f32 0.0, %v384
        %386 = vdwg.mxu0
        %v387 = vunpack.c.l.bf16 %v314
        %v388 = vunpack.c.l.bf16 %v315
        %v389 = vmul.f32 %v383, %v387
        %v390 = vmul.f32 %v385, %v388
        %v391 = vsel %vm330, %v389, 0.0
        %392 = vadd.xlane.f32.xlu0 %v391
        %v393 = vpop.xlane.xlu0 %392
        %v394 = vsel %vm330, %v390, 0.0
        %395 = vadd.xlane.f32.xlu0 %v394
        %v396 = vpop.xlane.xlu0 %395
        %v397 = vmul.f32 %v393, 0.0625
        %v398 = vmul.f32 %v396, 0.0625
        %v399 = vsub.f32 %v360, %v397
        %v400 = vsub.f32 %v363, %v398
        %vm401 = vcmask 7168
        %402 = vst.msk [vmem:[%s311] sm:$0xff] %vm401, %v399
        %403 = vst.msk [vmem:[%s311 + $0x8] sm:$0xff] %vm401, %v400
        %s404 = smul.u32 2, %s25
        %p405 = scmp.lt.s32.totalorder %s26, 1
        %s406 = scalar_select %p405, %s26, 1
        %p407 = scmp.lt.s32.totalorder %s27, 3
        %s408 = scalar_select %p407, %s27, 3
        %p409 = scmp.lt.s32.totalorder %s404, 1
        %s410 = scalar_select %p409, %s404, 1
        %s411 = smul.addr %s408, 2
        %s412 = sadd.s32 %s410, %s411
        %s413 = smul.addr %s406, 8
        %s414 = sadd.s32 %s412, %s413
        %s415 = smul.addr %s414, 8
        %s416 = scalar_lea.vmem %s3, %s415
        // Predicated region
        $region45: #{tpu_custom_call.1} parent=31 // pred_check
          %p417 = pneg %p145
        $region46: #{tpu_custom_call.1} parent=31 // pred_check_branch
          %419 = sbr.rel (%p417) target = $region48
        $region47: #{tpu_custom_call.1} parent=31 // pred_region
          %s420 = smul.u32 2, %s25
        $region48: #{tpu_custom_call.1} parent=31 // pred_fallthru
          _
      $region32: #{tpu_custom_call.1} parent=5 // pred_fallthru
        _
      %p421 = scmp.le.s32.totalorder 2, %s15
      // Predicated region
      $region49: #{tpu_custom_call.1} parent=5 // pred_check
        %p422 = pneg %p421
      $region50: #{tpu_custom_call.1} parent=5 // pred_check_branch
        %424 = sbr.rel (%p422) target = $region52
      $region51: #{tpu_custom_call.1} parent=5 // pred_region
        %s425 = ssub.s32 %s15, 2
        // Predicated region
        $region53: #{tpu_custom_call.1} parent=51 // pred_check
          %p426 = pneg %p151
        $region54: #{tpu_custom_call.1} parent=51 // pred_check_branch
          %428 = sbr.rel (%p426) target = $region56
        $region55: #{tpu_custom_call.1} parent=51 // pred_region
          %s429 = smul.u32 2, %s28
          %p430 = scmp.lt.s32.totalorder %s29, 1
          %s431 = scalar_select %p430, %s29, 1
          %p432 = scmp.lt.s32.totalorder %s30, 3
          %s433 = scalar_select %p432, %s30, 3
          %p434 = scmp.lt.s32.totalorder %s429, 1
          %s435 = scalar_select %p434, %s429, 1
          %s436 = smul.addr %s433, 2
          %s437 = sadd.s32 %s435, %s436
          %s438 = smul.addr %s431, 8
          %s439 = sadd.s32 %s437, %s438
          %s440 = smul.addr %s439, 8
          %s441 = scalar_lea.vmem %s3, %s440
        $region56: #{tpu_custom_call.1} parent=51 // pred_fallthru
          _
      $region52: #{tpu_custom_call.1} parent=5 // pred_fallthru
        _
    $region6: #{tpu_custom_call.1} parent=1 // loop_footer
      %s19 = sadd.s32 1, %s15
    $region7: #{tpu_custom_call.1} parent=1 // loop_footer_branch
      %14 = sbr.rel target = $region3
    $region8: #{tpu_custom_call.1} parent=1 // loop_exit
      _
    %442 = vsyncpa [#allocation3], 1
    %s443 = scalar_lea.sflag [#allocation3], 1
    %444 = vsyncpa %s443, 1
    %445 = vsyncpa [#allocation5], 1
    %s446 = scalar_lea.sflag [#allocation5], 1
    %447 = vsyncpa %s446, 1

</llo_original>
